<compile_context>
chip_gen: v7x
topology: tpu7x:2x2x1
jax: 0.10.0
libtpu: 0.0.40
codegen_flags: <defaults>
</compile_context>

<pallas_src>
import math
import numpy as np
import jax
import jax.numpy as jnp
from jax.experimental import pallas as pl
from jax.experimental.pallas import tpu as pltpu

# ---- shapes consistent with the module / its surrounding file ----
B, S = 2, 8
D_MODEL, D_FF = 32, 64
LANES = 128
ROWS = B * S                       # batch folded into the sublane/row dim

# Weight slab (bf16) row layout:
#   rows [0:32)   -> W1 (d_model x d_ff), zero-padded to 128 lanes
#   rows [32:160) -> W2 (d_ff x d_model), zero-padded to 128 rows x 128 lanes
W1_R0, W1_R1 = 0, D_MODEL
W2_R0, W2_R1 = D_MODEL, D_MODEL + LANES
W_SLAB_ROWS = W2_R1                # 160 rows (multiple of 16 -> aligned bf16 tiles)
B_SLAB_ROWS = 8                    # bias slab: row 0 = b1, row 1 = b2, rest zero


def feedforward_kernel(x_ref, w_ref, b_ref, o_ref):
    x = x_ref[...]                                   # (ROWS, D_MODEL) f32

    # Sublane-only slices of the packed parameter slabs (lane-aligned, free).
    w1 = w_ref[W1_R0:W1_R1, :]                       # (32, 128)  bf16
    w2 = w_ref[W2_R0:W2_R1, :]                       # (128, 128) bf16
    b1 = b_ref[0:1, :]                               # (1, 128)   f32
    b2 = b_ref[1:2, :]                               # (1, 128)   f32

    # Linear1 + ReLU: bf16 MXU operands, f32 accumulate, f32 elementwise.
    h = jnp.dot(x.astype(jnp.bfloat16), w1,
                preferred_element_type=jnp.float32) + b1      # (ROWS, 128)
    h = jnp.maximum(h, 0.0)
    # Linear2. Zero-padded lanes of h / rows of w2 contribute exact zeros.
    y = jnp.dot(h.astype(jnp.bfloat16), w2,
                preferred_element_type=jnp.float32) + b2      # (ROWS, 128)
    o_ref[...] = y                                   # lane-dense (ROWS, 128) store


def feedforward_forward(x, w1, b1, w2, b2):
    b, s, d = x.shape
    rows = b * s
    x2 = x.reshape(rows, d)                          # fold batch into rows

    # --- wrapper-side packing (pure layout work, no math changes) ---
    wslab = jnp.zeros((W_SLAB_ROWS, LANES), jnp.bfloat16)
    wslab = wslab.at[W1_R0:W1_R1, 0:D_FF].set(w1.astype(jnp.bfloat16))
    wslab = wslab.at[W2_R0:W2_R0 + D_FF, 0:D_MODEL].set(w2.astype(jnp.bfloat16))

    bslab = jnp.zeros((B_SLAB_ROWS, LANES), jnp.float32)
    bslab = bslab.at[0, 0:D_FF].set(b1.reshape(-1))
    bslab = bslab.at[1, 0:D_MODEL].set(b2.reshape(-1))

    out = pl.pallas_call(
        feedforward_kernel,
        out_shape=jax.ShapeDtypeStruct((rows, LANES), jnp.float32),
        grid=(1,),
        in_specs=[pl.BlockSpec((rows, d), lambda i: (0, 0)),
                  pl.BlockSpec((W_SLAB_ROWS, LANES), lambda i: (0, 0)),
                  pl.BlockSpec((B_SLAB_ROWS, LANES), lambda i: (0, 0))],
        out_specs=pl.BlockSpec((rows, LANES), lambda i: (0, 0)),
        compiler_params=pltpu.CompilerParams(
            dimension_semantics=("arbitrary",)),
    )(x2, wslab, bslab)

    return out[:, 0:D_MODEL].reshape(b, s, D_MODEL)


# ---------- pure-JAX reference with the same numerical contract ----------
# (bf16 matmul operands, f32 accumulation, f32 bias/ReLU — identical to the
# kernel, so the tolerance can be tight again per the review.)
def reference_forward(x, w1, b1, w2, b2):
    h = jnp.dot(x.astype(jnp.bfloat16), w1.astype(jnp.bfloat16),
                preferred_element_type=jnp.float32) + b1
    h = jnp.maximum(h, 0.0)
    return jnp.dot(h.astype(jnp.bfloat16), w2.astype(jnp.bfloat16),
                   preferred_element_type=jnp.float32) + b2


def init_params(key):
    # Matches torch.nn.Linear default init: U(-1/sqrt(fan_in), 1/sqrt(fan_in)).
    def linear(k, fan_in, fan_out):
        k1, k2 = jax.random.split(k)
        bound = 1.0 / math.sqrt(fan_in)
        w = jax.random.uniform(k1, (fan_in, fan_out), jnp.float32, -bound, bound)
        b = jax.random.uniform(k2, (1, fan_out), jnp.float32, -bound, bound)
        return w, b

    k1, k2 = jax.random.split(key)
    w1, b1 = linear(k1, D_MODEL, D_FF)
    w2, b2 = linear(k2, D_FF, D_MODEL)
    return w1, b1, w2, b2


if __name__ == "__main__":
    key = jax.random.PRNGKey(0)
    kx, kp = jax.random.split(key)
    x = jax.random.normal(kx, (B, S, D_MODEL), jnp.float32)
    w1, b1, w2, b2 = init_params(kp)

    out = jax.block_until_ready(feedforward_forward(x, w1, b1, w2, b2))
    ref = jax.block_until_ready(reference_forward(x, w1, b1, w2, b2))

    assert out.shape == (B, S, D_MODEL)
    np.testing.assert_allclose(np.asarray(out), np.asarray(ref),
                               rtol=1e-4, atol=1e-4)
    print("KERNEL_OK")
</pallas_src>

<mosaic_0001>
module attributes {stable_mosaic.version = 11 : i64} {
  func.func @feedforward_kernel(%arg0: i32, %arg1: memref<16x32xf32, #tpu.memory_space<vmem>>, %arg2: memref<160x128xbf16, #tpu.memory_space<vmem>>, %arg3: memref<8x128xf32, #tpu.memory_space<vmem>>, %arg4: memref<16x128xf32, #tpu.memory_space<vmem>>) attributes {dimension_semantics = [#tpu.dimension_semantics<arbitrary>], iteration_bounds = array<i64: 1>, scalar_prefetch = 0 : i64, scratch_operands = 0 : i64, tpu.core_type = #tpu.core_type<tc>, window_params = [{pipeline_mode = #tpu.pipeline_mode<synchronous>, transform_indices = @transform_0, window_bounds = array<i64: 16, 32>}, {pipeline_mode = #tpu.pipeline_mode<synchronous>, transform_indices = @transform_1, window_bounds = array<i64: 160, 128>}, {pipeline_mode = #tpu.pipeline_mode<synchronous>, transform_indices = @transform_2, window_bounds = array<i64: 8, 128>}, {pipeline_mode = #tpu.pipeline_mode<synchronous>, transform_indices = @transform_3, window_bounds = array<i64: 16, 128>}]} {
    %c0 = arith.constant 0 : index
    %c0_0 = arith.constant 0 : index
    %0 = vector.load %arg1[%c0, %c0_0] : memref<16x32xf32, #tpu.memory_space<vmem>>, vector<16x32xf32>
    %c0_1 = arith.constant 0 : index
    %c0_2 = arith.constant 0 : index
    %1 = vector.load %arg2[%c0_1, %c0_2] : memref<160x128xbf16, #tpu.memory_space<vmem>>, vector<32x128xbf16>
    %c32 = arith.constant 32 : index
    %c0_3 = arith.constant 0 : index
    %2 = vector.load %arg2[%c32, %c0_3] : memref<160x128xbf16, #tpu.memory_space<vmem>>, vector<128x128xbf16>
    %c0_4 = arith.constant 0 : index
    %c0_5 = arith.constant 0 : index
    %3 = vector.load %arg3[%c0_4, %c0_5] : memref<8x128xf32, #tpu.memory_space<vmem>>, vector<1x128xf32>
    %c1 = arith.constant 1 : index
    %c0_6 = arith.constant 0 : index
    %4 = vector.load %arg3[%c1, %c0_6] : memref<8x128xf32, #tpu.memory_space<vmem>>, vector<1x128xf32>
    %5 = arith.truncf %0 : vector<16x32xf32> to vector<16x32xbf16>
    %cst = arith.constant dense<0.000000e+00> : vector<16x128xf32>
    %6 = tpu.matmul %5, %1, %cst {dimension_numbers = #tpu.dot_dimension_numbers<[1], [0], [0], [1], [0, 0, 1, 1], [], []>} : vector<16x32xbf16>, vector<32x128xbf16>, vector<16x128xf32> -> vector<16x128xf32>
    %7 = vector.broadcast %3 : vector<1x128xf32> to vector<16x128xf32>
    %8 = arith.addf %6, %7 : vector<16x128xf32>
    %cst_7 = arith.constant 0.000000e+00 : f32
    %9 = vector.broadcast %cst_7 : f32 to vector<16x128xf32>
    %10 = arith.maximumf %8, %9 : vector<16x128xf32>
    %11 = arith.truncf %10 : vector<16x128xf32> to vector<16x128xbf16>
    %cst_8 = arith.constant dense<0.000000e+00> : vector<16x128xf32>
    %12 = tpu.matmul %11, %2, %cst_8 {dimension_numbers = #tpu.dot_dimension_numbers<[1], [0], [0], [1], [0, 0, 1, 1], [], []>} : vector<16x128xbf16>, vector<128x128xbf16>, vector<16x128xf32> -> vector<16x128xf32>
    %13 = vector.broadcast %4 : vector<1x128xf32> to vector<16x128xf32>
    %14 = arith.addf %12, %13 : vector<16x128xf32>
    %c0_9 = arith.constant 0 : index
    %c0_10 = arith.constant 0 : index
    %15 = vector.load %arg4[%c0_9, %c0_10] : memref<16x128xf32, #tpu.memory_space<vmem>>, vector<16x128xf32>
    tpu.vector_store %arg4[%c0_9, %c0_10], %14 {strides = array<i32>} : memref<16x128xf32, #tpu.memory_space<vmem>>, vector<16x128xf32>,
    return
  }
  func.func @transform_0(%arg0: i32) -> (i32, i32) {
    %c0_i32 = arith.constant 0 : i32
    %c0_i32_0 = arith.constant 0 : i32
    %c0_i32_1 = arith.constant 0 : i32
    return %c0_i32, %c0_i32_0 : i32, i32
  }
  func.func @transform_1(%arg0: i32) -> (i32, i32) {
    %c0_i32 = arith.constant 0 : i32
    %c0_i32_0 = arith.constant 0 : i32
    %c0_i32_1 = arith.constant 0 : i32
    return %c0_i32, %c0_i32_0 : i32, i32
  }
  func.func @transform_2(%arg0: i32) -> (i32, i32) {
    %c0_i32 = arith.constant 0 : i32
    %c0_i32_0 = arith.constant 0 : i32
    %c0_i32_1 = arith.constant 0 : i32
    return %c0_i32, %c0_i32_0 : i32, i32
  }
  func.func @transform_3(%arg0: i32) -> (i32, i32) {
    %c0_i32 = arith.constant 0 : i32
    %c0_i32_0 = arith.constant 0 : i32
    %c0_i32_1 = arith.constant 0 : i32
    return %c0_i32, %c0_i32_0 : i32, i32
  }
}

</mosaic_0001>

<llo_original>
// kernel: tpu_custom_call.1
$region0: #{tpu_custom_call.1}
  #allocation0 [shape = 'u32[]', space=smem, size = 0x4, offset = 0x4, fixed_abs, tag = 'smem constant byte address 0x4 - core index']
  #allocation1 [shape = 'u32[144,128]{1,0:T(1,128)}', space=vmem, size = 0x12000, scoped, tag = 'internal scratch']
  %s0 = inlined_call_operand.hbm [shape: f32[16,32], index: 0, kind: input, shape index: {}]
  %s1 = inlined_call_operand.hbm [shape: bf16[160,128], index: 1, kind: input, shape index: {}]
  %s2 = inlined_call_operand.hbm [shape: f32[8,128], index: 2, kind: input, shape index: {}]
  %s3 = inlined_call_operand.hbm [shape: f32[16,128], index: 3, kind: output, shape index: {}]
  %s4 = sld [smem:[#allocation0]]
  $region34: #{tpu_custom_call.1} parent=0
    _
  %s6 = ssub.s32 1, %s4
  %s7 = scalar_select 0, %s6, %s4
  $region1: #{tpu_custom_call.1} parent=0
    #allocation2 [shape = 'u8[8192]{0}', space=vmem, size = 0x2000, scoped, tag = 'input window, operand 0, single buffered']
    #allocation3 [shape = 's32[1]{0}', space=sflag, size = 0x4, scoped, tag = 'scoped memory for tpu_custom_call.1']
    #allocation4 [shape = 's32[1]{0}', space=sflag, size = 0x4, scoped, tag = 'scoped memory for tpu_custom_call.1']
    #allocation5 [shape = 'u8[40960]{0}', space=vmem, size = 0xa000, scoped, tag = 'input window, operand 1, single buffered']
    #allocation6 [shape = 's32[1]{0}', space=sflag, size = 0x4, scoped, tag = 'scoped memory for tpu_custom_call.1']
    #allocation7 [shape = 'u8[4096]{0}', space=vmem, size = 0x1000, scoped, tag = 'input window, operand 2, single buffered']
    #allocation8 [shape = 'u8[8192]{0}', space=vmem, size = 0x2000, scoped, tag = 'output window, operand 0, single buffered']
    %8 = vsyncpa [#allocation3], 0
    %9 = vsyncpa [#allocation6], 0
    %10 = vsyncpa [#allocation4], 0
    // Predicated region
    $region2: #{tpu_custom_call.1} parent=1 // pred_check
      _
    $region3: #{tpu_custom_call.1} parent=1 // pred_check_branch
      %12 = sbr.rel (0) target = $region5
    $region4: #{tpu_custom_call.1} parent=1 // pred_region
      %s14 = ssub.s32 256, 256
      %15 = vsyncadd [#allocation3], %s14
      %s16 = sshll.u32 [#allocation2], 4
      %s17 = int_to_ptr.vmem [resolvable:$true] %s16
      %22 = dma.hbm_to_vmem [thread:$0]  %s0, 256, %s17, [#allocation3], 128, 128, 8
    $region5: #{tpu_custom_call.1} parent=1 // pred_fallthru
      _
    // Predicated region
    $region6: #{tpu_custom_call.1} parent=1 // pred_check
      _
    $region7: #{tpu_custom_call.1} parent=1 // pred_check_branch
      %24 = sbr.rel (0) target = $region9
    $region8: #{tpu_custom_call.1} parent=1 // pred_region
      %s26 = ssub.s32 1280, 1280
      %27 = vsyncadd [#allocation6], %s26
      %s28 = sshll.u32 [#allocation5], 4
      %s29 = int_to_ptr.vmem [resolvable:$true] %s28
      %34 = dma.hbm_to_vmem [thread:$0]  %s1, 1280, %s29, [#allocation6], 64, 64, 4
    $region9: #{tpu_custom_call.1} parent=1 // pred_fallthru
      _
    // Predicated region
    $region10: #{tpu_custom_call.1} parent=1 // pred_check
      _
    $region11: #{tpu_custom_call.1} parent=1 // pred_check_branch
      %36 = sbr.rel (0) target = $region13
    $region12: #{tpu_custom_call.1} parent=1 // pred_region
      %s38 = ssub.s32 128, 128
      %39 = vsyncadd [#allocation6], %s38
      %s41 = sshll.u32 [#allocation7], 4
      %s42 = int_to_ptr.vmem [resolvable:$true] %s41
      %44 = dma.hbm_to_vmem [thread:$0]  %s2, 128, %s42, [#allocation6]
    $region13: #{tpu_custom_call.1} parent=1 // pred_fallthru
      _
    // Predicated region
    $region14: #{tpu_custom_call.1} parent=1 // pred_check
      _
    $region15: #{tpu_custom_call.1} parent=1 // pred_check_branch
      %46 = sbr.rel (0) target = $region17
    $region16: #{tpu_custom_call.1} parent=1 // pred_region
      %47 = dma.done [#allocation3], 256
    $region17: #{tpu_custom_call.1} parent=1 // pred_fallthru
      _
    // Predicated region
    $region18: #{tpu_custom_call.1} parent=1 // pred_check
      _
    $region19: #{tpu_custom_call.1} parent=1 // pred_check_branch
      %49 = sbr.rel (0) target = $region21
    $region20: #{tpu_custom_call.1} parent=1 // pred_region
      %50 = dma.done [#allocation6], 1280
    $region21: #{tpu_custom_call.1} parent=1 // pred_fallthru
      _
    // Predicated region
    $region22: #{tpu_custom_call.1} parent=1 // pred_check
      _
    $region23: #{tpu_custom_call.1} parent=1 // pred_check_branch
      %52 = sbr.rel (0) target = $region25
    $region24: #{tpu_custom_call.1} parent=1 // pred_region
      %53 = dma.done [#allocation6], 128
    $region25: #{tpu_custom_call.1} parent=1 // pred_fallthru
      _
    %v55 = vld [vmem:[#allocation2] sm:$0xff]
    %v56 = vld [vmem:[#allocation2 + $0x8] sm:$0xff]
    %v57 = vld [vmem:[#allocation5] sm:$0xf]
    %v58 = vld [vmem:[#allocation5 + $0x4] sm:$0xf]
    %v59 = vld [vmem:[#allocation5 + $0x8] sm:$0xf]
    %v60 = vld [vmem:[#allocation5 + $0xc] sm:$0xf]
    %v61 = vld [vmem:[#allocation5 + $0x10] sm:$0xf]
    %v62 = vld [vmem:[#allocation5 + $0x14] sm:$0xf]
    %v63 = vld [vmem:[#allocation5 + $0x18] sm:$0xf]
    %v64 = vld [vmem:[#allocation5 + $0x1c] sm:$0xf]
    %v65 = vld [vmem:[#allocation5 + $0x20] sm:$0xf]
    %v66 = vld [vmem:[#allocation5 + $0x24] sm:$0xf]
    %v67 = vld [vmem:[#allocation5 + $0x28] sm:$0xf]
    %v68 = vld [vmem:[#allocation5 + $0x2c] sm:$0xf]
    %v69 = vld [vmem:[#allocation5 + $0x30] sm:$0xf]
    %v70 = vld [vmem:[#allocation5 + $0x34] sm:$0xf]
    %v71 = vld [vmem:[#allocation5 + $0x38] sm:$0xf]
    %v72 = vld [vmem:[#allocation5 + $0x3c] sm:$0xf]
    %v73 = vld [vmem:[#allocation5 + $0x40] sm:$0xf]
    %v74 = vld [vmem:[#allocation5 + $0x44] sm:$0xf]
    %v75 = vld [vmem:[#allocation5 + $0x48] sm:$0xf]
    %v76 = vld [vmem:[#allocation5 + $0x4c] sm:$0xf]
    %v77 = vld [vmem:[#allocation7] sm:$0x1]
    %v78 = vld [vmem:[#allocation7 + $0x1] sm:$0x1]
    %v79 = vpack.c.bf16 %v56, %v55
    %v80 = vlaneseq
    %v81 = vshrl.u32 %v80, 7
    %v82 = vsub.s32 0, %v81
    %v83 = vrot.slane %v77, %v82
    %v88 = vunpack.c.l.b16 %v57
    %v89 = vunpack.c.l.b16 %v58
    %v90 = vunpack.c.l.b16 %v59
    %v91 = vunpack.c.l.b16 %v60
    %v92 = vpack.c.b16 %v89, %v88
    %v93 = vpack.c.b16 %v91, %v90
    %vm96 = vcmask 261120
    %v98 = vsel %vm96, %v79, 0
    %100 = vmatprep.subr.bf16.mxu0 0
    %101 = vmatpush1.bf16.msra.mxu0 %v92
    %102 = vmatprep.subr.bf16.mxu0 0
    %103 = vmatpush1.bf16.msra.mxu0 %v93
    %104 = vmatprep.subr.bf16.mxu0 0
    %105 = vmatpush1.bf16.msra.mxu0 0
    %106 = vmatprep.subr.bf16.mxu0 0
    %107 = vmatpush1.bf16.msra.mxu0 0
    %108 = vmatprep.subr.bf16.mxu0 0
    %109 = vmatpush1.bf16.msra.mxu0 0
    %110 = vmatprep.subr.bf16.mxu0 0
    %111 = vmatpush1.bf16.msra.mxu0 0
    %112 = vmatprep.subr.bf16.mxu0 0
    %113 = vmatpush1.bf16.msra.mxu0 0
    %114 = vmatprep.subr.bf16.mxu0 0
    %115 = vmatpush1.bf16.msra.mxu0 0
    %116 = vmatprep.subr.bf16.mxu0 0
    %117 = vmatpush1.bf16.msra.mxu0 0
    %118 = vmatprep.subr.bf16.mxu0 0
    %119 = vmatpush1.bf16.msra.mxu0 0
    %120 = vmatprep.subr.bf16.mxu0 0
    %121 = vmatpush1.bf16.msra.mxu0 0
    %122 = vmatprep.subr.bf16.mxu0 0
    %123 = vmatpush1.bf16.msra.mxu0 0
    %124 = vmatprep.subr.bf16.mxu0 0
    %125 = vmatpush1.bf16.msra.mxu0 0
    %126 = vmatprep.subr.bf16.mxu0 0
    %127 = vmatpush1.bf16.msra.mxu0 0
    %128 = vmatprep.subr.bf16.mxu0 0
    %129 = vmatpush1.bf16.msra.mxu0 0
    %130 = vmatprep.subr.bf16.mxu0 0
    %131 = vmatpush1.bf16.msra.mxu0 0
    %132 = vmatprep.mubr.bf16.mxu0 0
    %133 = vmatmul.mubr.bf16.gmra.mrb[0].mxu0 %v98
    %v134 = vpop.f32.mrb[0].mxu0
    %v135 = vadd.f32 %v83, %v134
    %v136 = vpop.f32.mrb[0].mxu0
    %v137 = vpop.f32.mrb[0].mxu0
    %v138 = vadd.f32 %v83, %v137
    %v139 = vpop.f32.mrb[0].mxu0
    %140 = vdwg.mxu0
    %v141 = vmax.f32 %v135, 0.0
    %v142 = vmax.f32 %v138, 0.0
    %v143 = vpack.c.bf16 %v142, %v141
    %v144 = vlaneseq
    %v145 = vshrl.u32 %v144, 7
    %v146 = vsub.s32 0, %v145
    %v147 = vrot.slane %v78, %v146
    %v164 = vunpack.c.l.b16 %v61
    %v165 = vunpack.c.l.b16 %v62
    %v166 = vunpack.c.l.b16 %v63
    %v167 = vunpack.c.l.b16 %v64
    %v168 = vunpack.c.l.b16 %v65
    %v169 = vunpack.c.l.b16 %v66
    %v170 = vunpack.c.l.b16 %v67
    %v171 = vunpack.c.l.b16 %v68
    %v172 = vunpack.c.l.b16 %v69
    %v173 = vunpack.c.l.b16 %v70
    %v174 = vunpack.c.l.b16 %v71
    %v175 = vunpack.c.l.b16 %v72
    %v176 = vunpack.c.l.b16 %v73
    %v177 = vunpack.c.l.b16 %v74
    %v178 = vunpack.c.l.b16 %v75
    %v179 = vunpack.c.l.b16 %v76
    %v180 = vpack.c.b16 %v165, %v164
    %v181 = vpack.c.b16 %v167, %v166
    %v182 = vpack.c.b16 %v169, %v168
    %v183 = vpack.c.b16 %v171, %v170
    %v184 = vpack.c.b16 %v173, %v172
    %v185 = vpack.c.b16 %v175, %v174
    %v186 = vpack.c.b16 %v177, %v176
    %v187 = vpack.c.b16 %v179, %v178
    %196 = vmatprep.subr.bf16.mxu0 0
    %197 = vmatpush1.bf16.msra.mxu0 %v180
    %198 = vmatprep.subr.bf16.mxu0 0
    %199 = vmatpush1.bf16.msra.mxu0 %v181
    %200 = vmatprep.subr.bf16.mxu0 0
    %201 = vmatpush1.bf16.msra.mxu0 %v182
    %202 = vmatprep.subr.bf16.mxu0 0
    %203 = vmatpush1.bf16.msra.mxu0 %v183
    %204 = vmatprep.subr.bf16.mxu0 0
    %205 = vmatpush1.bf16.msra.mxu0 %v184
    %206 = vmatprep.subr.bf16.mxu0 0
    %207 = vmatpush1.bf16.msra.mxu0 %v185
    %208 = vmatprep.subr.bf16.mxu0 0
    %209 = vmatpush1.bf16.msra.mxu0 %v186
    %210 = vmatprep.subr.bf16.mxu0 0
    %211 = vmatpush1.bf16.msra.mxu0 %v187
    %212 = vmatprep.subr.bf16.mxu0 0
    %213 = vmatpush1.bf16.msra.mxu0 0
    %214 = vmatprep.subr.bf16.mxu0 0
    %215 = vmatpush1.bf16.msra.mxu0 0
    %216 = vmatprep.subr.bf16.mxu0 0
    %217 = vmatpush1.bf16.msra.mxu0 0
    %218 = vmatprep.subr.bf16.mxu0 0
    %219 = vmatpush1.bf16.msra.mxu0 0
    %220 = vmatprep.subr.bf16.mxu0 0
    %221 = vmatpush1.bf16.msra.mxu0 0
    %222 = vmatprep.subr.bf16.mxu0 0
    %223 = vmatpush1.bf16.msra.mxu0 0
    %224 = vmatprep.subr.bf16.mxu0 0
    %225 = vmatpush1.bf16.msra.mxu0 0
    %226 = vmatprep.subr.bf16.mxu0 0
    %227 = vmatpush1.bf16.msra.mxu0 0
    %228 = vmatprep.mubr.bf16.mxu0 0
    %229 = vmatmul.mubr.bf16.gmra.mrb[0].mxu0 %v143
    %v230 = vpop.f32.mrb[0].mxu0
    %v231 = vadd.f32 %v147, %v230
    %v232 = vpop.f32.mrb[0].mxu0
    %v233 = vpop.f32.mrb[0].mxu0
    %v234 = vadd.f32 %v147, %v233
    %v235 = vpop.f32.mrb[0].mxu0
    %236 = vdwg.mxu0
    %237 = vst [vmem:[#allocation8] sm:$0xff] %v231
    %238 = vst [vmem:[#allocation8 + $0x8] sm:$0xff] %v234
    // Predicated region
    $region26: #{tpu_custom_call.1} parent=1 // pred_check
      _
    $region27: #{tpu_custom_call.1} parent=1 // pred_check_branch
      %240 = sbr.rel (0) target = $region29
    $region28: #{tpu_custom_call.1} parent=1 // pred_region
      %s242 = ssub.s32 256, 256
      %243 = vsyncadd [#allocation4], %s242
      %s244 = sshll.u32 [#allocation8], 4
      %s245 = int_to_ptr.vmem [resolvable:$true] %s244
      %250 = dma.vmem_to_hbm [thread:$0]  %s245, 256, %s3, [#allocation4], 128, 128, 8
    $region29: #{tpu_custom_call.1} parent=1 // pred_fallthru
      _
    // Predicated region
    $region30: #{tpu_custom_call.1} parent=1 // pred_check
      _
    $region31: #{tpu_custom_call.1} parent=1 // pred_check_branch
      %252 = sbr.rel (0) target = $region33
    $region32: #{tpu_custom_call.1} parent=1 // pred_region
      %253 = dma.done [#allocation4], 256
    $region33: #{tpu_custom_call.1} parent=1 // pred_fallthru
      _
    %254 = vsyncpa [#allocation3], 1
    %255 = vsyncpa [#allocation6], 1
    %256 = vsyncpa [#allocation4], 1

</llo_original>
